<compile_context>
chip_gen: v6e
topology: v6e:2x2x1
jax: 0.10.0
libtpu: 0.0.40
codegen_flags: <defaults>
</compile_context>

<pallas_src>
import jax
import jax.numpy as jnp
from jax.experimental import pallas as pl
from jax.experimental.pallas import tpu as pltpu

_LANE = 128      # lane width (last-dim alignment)
_SUBLANE = 8     # sublane (second-to-last dim alignment, f32)
_SMALL_WEIGHT_STACK_BYTES = 4 * 1024 * 1024   # threshold for the fully-resident path
_DEFAULT_BATCH_TILE = 256


def _round_up(x, m):
    return (x + m - 1) // m * m


def _vmem_budget_bytes(footprint_bytes):
    """Footprint + headroom, capped below physical VMEM of the current generation."""
    try:
        cap = int(pltpu.get_tpu_info().vmem_capacity_bytes)
    except Exception:
        cap = 64 * 1024 * 1024  # assume the tightest generation (v7x: 64 MiB / TC)
    budget = 2 * int(footprint_bytes) + (4 << 20)
    budget = max(budget, 16 << 20)
    return min(budget, int(cap * 0.85))


def _make_layer_grid_kernel(din_pad, nout_pad, p):
    """grid = (batch_tiles, layers). One step == one Linear (+ReLU except last layer).

    x_ref:   [TB, din_pad]   narrow input block (read at layer 0 only)
    w_ref:   [P, P]          this layer's weight, [in, out] layout, zero padded
    b_ref:   [1, P]          this layer's bias, zero padded
    o_ref:   [TB, nout_pad]  narrow output block (written at the last layer only)
    act_ref: [TB, P]         f32 VMEM-resident activations, carried across layers
    """

    def kernel(x_ref, w_ref, b_ref, o_ref, act_ref):
        layer = pl.program_id(1)
        n_layers = pl.num_programs(1)

        @pl.when(layer == 0)
        def _():
            # Padded columns stay exactly 0 through every layer because padded
            # weight rows/cols and biases are exactly 0 and ReLU(0) == 0.
            if din_pad == p:
                act_ref[...] = x_ref[...].astype(jnp.float32)
            else:
                act_ref[...] = jnp.zeros_like(act_ref)
                act_ref[:, :din_pad] = x_ref[...].astype(jnp.float32)

        w = w_ref[...]
        acc = jnp.dot(act_ref[...].astype(w.dtype), w,
                      preferred_element_type=jnp.float32)
        acc = acc + b_ref[...]

        @pl.when(layer < n_layers - 1)
        def _():
            act_ref[...] = jnp.maximum(acc, 0.0)

        @pl.when(layer == n_layers - 1)
        def _():
            # Correct with the batch grid axis because the output index_map is
            # constant across the layer axis and changes only per batch tile.
            o_ref[...] = acc[:, :nout_pad].astype(o_ref.dtype)

    return kernel


def _make_resident_kernel(num_layers, din_pad, nout_pad, p):
    """Tiny-network path: whole weight/bias stacks VMEM-resident, single grid step
    per batch tile, layer loop unrolled at trace time."""

    def kernel(x_ref, w_ref, b_ref, o_ref):
        w_dtype = w_ref.dtype
        act = x_ref[...].astype(jnp.float32)   # (TB, din_pad)
        k = din_pad
        acc = act
        for layer in range(num_layers):
            acc = jnp.dot(act.astype(w_dtype), w_ref[layer, :k, :],
                          preferred_element_type=jnp.float32)
            acc = acc + b_ref[layer]
            if layer < num_layers - 1:
                act = jnp.maximum(acc, 0.0)
                k = p
        o_ref[...] = acc[:, :nout_pad].astype(o_ref.dtype)

    return kernel


def init_fully_connected_params(architecture, key):
    """Deterministic init mimicking torch.nn.Linear default
    (U[-1/sqrt(fan_in), 1/sqrt(fan_in)]). Returns list of (weight [out,in], bias [out])."""
    params = []
    for i in range(len(architecture) - 1):
        fan_in, fan_out = architecture[i], architecture[i + 1]
        key, wk, bk = jax.random.split(key, 3)
        bound = 1.0 / jnp.sqrt(jnp.asarray(fan_in, jnp.float32))
        w = jax.random.uniform(wk, (fan_out, fan_in), jnp.float32,
                               minval=-bound, maxval=bound)
        b = jax.random.uniform(bk, (fan_out,), jnp.float32,
                               minval=-bound, maxval=bound)
        params.append((w, b))
    return params


def prepare_fully_connected_params(params, compute_dtype=jnp.bfloat16):
    """One-time packing: transpose torch-layout weights to [in,out], zero-pad all
    feature dims to a uniform lane-aligned width P, stack per layer, cast weights
    to compute_dtype (bf16 default: MXU-native, half the HBM traffic)."""
    dims = [params[0][0].shape[1]] + [w.shape[0] for w, _ in params]
    p = max(_round_up(d, _LANE) for d in dims)
    num_layers = len(params)
    w_stack = jnp.zeros((num_layers, p, p), compute_dtype)
    b_stack = jnp.zeros((num_layers, 1, p), jnp.float32)
    for i, (w, b) in enumerate(params):
        dout, din = w.shape
        w_stack = w_stack.at[i, :din, :dout].set(w.T.astype(compute_dtype))
        b_stack = b_stack.at[i, 0, :dout].set(b.astype(jnp.float32))
    return {"w": w_stack, "b": b_stack, "d_in": dims[0], "d_out": dims[-1]}


def fully_connected_forward(packed, x, *, batch_tile=_DEFAULT_BATCH_TILE,
                            force_layer_grid=False):
    """Fused forward pass: x [B, d_in] -> [B, d_out]."""
    w_stack, b_stack = packed["w"], packed["b"]
    d_in, d_out = packed["d_in"], packed["d_out"]
    num_layers, p, _ = w_stack.shape
    batch, din = x.shape
    assert din == d_in, f"expected {d_in} input features, got {din}"
    assert batch_tile % _SUBLANE == 0

    din_pad = _round_up(d_in, _LANE)
    nout_pad = _round_up(d_out, _LANE)
    wbytes = jnp.dtype(w_stack.dtype).itemsize

    # Batch tiling: leading "parallel" grid axis (megacore on v7x) + caps VMEM/step.
    tb = batch_tile if batch >= batch_tile else _round_up(max(batch, _SUBLANE), _SUBLANE)
    b_pad = _round_up(max(batch, tb), tb)
    n_btiles = b_pad // tb

    # Narrow padded input (only d_in -> din_pad lanes ever touch HBM).
    x_pad = jnp.zeros((b_pad, din_pad), jnp.float32).at[:batch, :d_in].set(
        x.astype(jnp.float32))

    small = (num_layers * p * p * wbytes <= _SMALL_WEIGHT_STACK_BYTES
             and not force_layer_grid)

    if small:
        kernel = _make_resident_kernel(num_layers, din_pad, nout_pad, p)
        grid = (n_btiles,)
        in_specs = [
            pl.BlockSpec((tb, din_pad), lambda bt: (bt, 0)),
            pl.BlockSpec((num_layers, p, p), lambda bt: (0, 0, 0)),   # resident
            pl.BlockSpec((num_layers, 1, p), lambda bt: (0, 0, 0)),   # resident
        ]
        out_specs = pl.BlockSpec((tb, nout_pad), lambda bt: (bt, 0))
        scratch_shapes = []
        dim_sem = ("parallel",)
        footprint = (num_layers * p * p * wbytes + num_layers * p * 4
                     + 2 * tb * din_pad * 4 + 2 * tb * nout_pad * 4
                     + 3 * tb * p * 4)
    else:
        kernel = _make_layer_grid_kernel(din_pad, nout_pad, p)
        grid = (n_btiles, num_layers)
        in_specs = [
            pl.BlockSpec((tb, din_pad), lambda bt, l: (bt, 0)),       # read at layer 0
            pl.BlockSpec((None, p, p), lambda bt, l: (l, 0, 0)),      # streamed weight
            pl.BlockSpec((None, 1, p), lambda bt, l: (l, 0, 0)),      # streamed bias
        ]
        out_specs = pl.BlockSpec((tb, nout_pad), lambda bt, l: (bt, 0))
        scratch_shapes = [pltpu.VMEM((tb, p), jnp.float32)]           # activation carry
        dim_sem = ("parallel", "arbitrary")
        footprint = (2 * p * p * wbytes + 2 * p * 4                   # dbl-buffered weights
                     + 2 * tb * din_pad * 4 + 2 * tb * nout_pad * 4
                     + 3 * tb * p * 4)

    out_pad = pl.pallas_call(
        kernel,
        out_shape=jax.ShapeDtypeStruct((b_pad, nout_pad), jnp.float32),
        grid=grid,
        in_specs=in_specs,
        out_specs=out_specs,
        scratch_shapes=scratch_shapes,
        compiler_params=pltpu.CompilerParams(
            dimension_semantics=dim_sem,
            vmem_limit_bytes=_vmem_budget_bytes(footprint),
        ),
    )(x_pad, w_stack, b_stack)

    return out_pad[:batch, :d_out]


def fully_connected_forward_ref(params, x, compute_dtype=jnp.float32):
    """Plain-JAX reference (torch-layout params). compute_dtype mirrors the kernel's
    MXU input rounding so bf16 runs can be compared at tight-ish tolerance."""
    n = len(params)
    x = x.astype(jnp.float32)
    for idx, (w, b) in enumerate(params):
        xc = x.astype(compute_dtype).astype(jnp.float32)
        wc = w.astype(compute_dtype).astype(jnp.float32)
        x = xc @ wc.T + b.astype(jnp.float32)
        if idx < n - 1:
            x = jnp.maximum(x, 0.0)
    return x


if __name__ == "__main__":
    # Small network like the docstring example, with non-aligned widths and batch
    # to exercise the padding paths.
    architecture = [4, 48, 32, 2]
    batch = 6

    key = jax.random.PRNGKey(0)
    key, xk = jax.random.split(key)
    x = jax.random.normal(xk, (batch, architecture[0]), jnp.float32)

    params = init_fully_connected_params(architecture, key)
    packed = prepare_fully_connected_params(params)   # bf16 weights by default

    ref = fully_connected_forward_ref(params, x, compute_dtype=jnp.bfloat16)

    # Path 1: tiny-network fully-resident single-step kernel.
    out_small = jax.block_until_ready(fully_connected_forward(packed, x))
    # Path 2: layer-streaming grid kernel (used automatically for larger nets).
    out_grid = jax.block_until_ready(
        fully_connected_forward(packed, x, force_layer_grid=True))

    assert out_small.shape == (batch, architecture[-1])
    assert out_grid.shape == (batch, architecture[-1])
    assert jnp.allclose(out_small, ref, atol=1e-2, rtol=1e-2), "resident path mismatch"
    assert jnp.allclose(out_grid, ref, atol=1e-2, rtol=1e-2), "layer-grid path mismatch"

    print("KERNEL_OK")
</pallas_src>

<mosaic_0001>
module attributes {stable_mosaic.version = 11 : i64} {
  func.func @kernel(%arg0: i32, %arg1: memref<8x128xf32, #tpu.memory_space<vmem>>, %arg2: memref<3x128x128xbf16, #tpu.memory_space<vmem>>, %arg3: memref<3x1x128xf32, #tpu.memory_space<vmem>>, %arg4: memref<8x128xf32, #tpu.memory_space<vmem>>) attributes {dimension_semantics = [#tpu.dimension_semantics<parallel>], iteration_bounds = array<i64: 1>, scalar_prefetch = 0 : i64, scratch_operands = 0 : i64, tpu.core_type = #tpu.core_type<tc>, window_params = [{transform_indices = @transform_0, window_bounds = array<i64: 8, 128>}, {pipeline_mode = #tpu.pipeline_mode<synchronous>, transform_indices = @transform_1, window_bounds = array<i64: 3, 128, 128>}, {pipeline_mode = #tpu.pipeline_mode<synchronous>, transform_indices = @transform_2, window_bounds = array<i64: 3, 1, 128>}, {transform_indices = @transform_3, window_bounds = array<i64: 8, 128>}]} {
    %c0 = arith.constant 0 : index
    %c0_0 = arith.constant 0 : index
    %0 = vector.load %arg1[%c0, %c0_0] : memref<8x128xf32, #tpu.memory_space<vmem>>, vector<8x128xf32>
    %1 = arith.truncf %0 : vector<8x128xf32> to vector<8x128xbf16>
    %c0_1 = arith.constant 0 : index
    %c0_2 = arith.constant 0 : index
    %c0_3 = arith.constant 0 : index
    %2 = vector.load %arg2[%c0_1, %c0_2, %c0_3] : memref<3x128x128xbf16, #tpu.memory_space<vmem>>, vector<1x128x128xbf16>
    %3 = vector.shape_cast %2 : vector<1x128x128xbf16> to vector<128x128xbf16>
    %cst = arith.constant dense<0.000000e+00> : vector<8x128xf32>
    %4 = tpu.matmul %1, %3, %cst {dimension_numbers = #tpu.dot_dimension_numbers<[1], [0], [0], [1], [0, 0, 1, 1], [], []>} : vector<8x128xbf16>, vector<128x128xbf16>, vector<8x128xf32> -> vector<8x128xf32>
    %c0_4 = arith.constant 0 : index
    %c0_5 = arith.constant 0 : index
    %c0_6 = arith.constant 0 : index
    %5 = vector.load %arg3[%c0_4, %c0_5, %c0_6] : memref<3x1x128xf32, #tpu.memory_space<vmem>>, vector<1x1x128xf32>
    %6 = vector.shape_cast %5 : vector<1x1x128xf32> to vector<1x128xf32>
    %7 = vector.broadcast %6 : vector<1x128xf32> to vector<8x128xf32>
    %8 = arith.addf %4, %7 : vector<8x128xf32>
    %cst_7 = arith.constant 0.000000e+00 : f32
    %9 = vector.broadcast %cst_7 : f32 to vector<8x128xf32>
    %10 = arith.maximumf %8, %9 : vector<8x128xf32>
    %11 = arith.truncf %10 : vector<8x128xf32> to vector<8x128xbf16>
    %c1 = arith.constant 1 : index
    %c0_8 = arith.constant 0 : index
    %c0_9 = arith.constant 0 : index
    %12 = vector.load %arg2[%c1, %c0_8, %c0_9] : memref<3x128x128xbf16, #tpu.memory_space<vmem>>, vector<1x128x128xbf16>
    %13 = vector.shape_cast %12 : vector<1x128x128xbf16> to vector<128x128xbf16>
    %cst_10 = arith.constant dense<0.000000e+00> : vector<8x128xf32>
    %14 = tpu.matmul %11, %13, %cst_10 {dimension_numbers = #tpu.dot_dimension_numbers<[1], [0], [0], [1], [0, 0, 1, 1], [], []>} : vector<8x128xbf16>, vector<128x128xbf16>, vector<8x128xf32> -> vector<8x128xf32>
    %c1_11 = arith.constant 1 : index
    %c0_12 = arith.constant 0 : index
    %c0_13 = arith.constant 0 : index
    %15 = vector.load %arg3[%c1_11, %c0_12, %c0_13] : memref<3x1x128xf32, #tpu.memory_space<vmem>>, vector<1x1x128xf32>
    %16 = vector.shape_cast %15 : vector<1x1x128xf32> to vector<1x128xf32>
    %17 = vector.broadcast %16 : vector<1x128xf32> to vector<8x128xf32>
    %18 = arith.addf %14, %17 : vector<8x128xf32>
    %cst_14 = arith.constant 0.000000e+00 : f32
    %19 = vector.broadcast %cst_14 : f32 to vector<8x128xf32>
    %20 = arith.maximumf %18, %19 : vector<8x128xf32>
    %21 = arith.truncf %20 : vector<8x128xf32> to vector<8x128xbf16>
    %c2 = arith.constant 2 : index
    %c0_15 = arith.constant 0 : index
    %c0_16 = arith.constant 0 : index
    %22 = vector.load %arg2[%c2, %c0_15, %c0_16] : memref<3x128x128xbf16, #tpu.memory_space<vmem>>, vector<1x128x128xbf16>
    %23 = vector.shape_cast %22 : vector<1x128x128xbf16> to vector<128x128xbf16>
    %cst_17 = arith.constant dense<0.000000e+00> : vector<8x128xf32>
    %24 = tpu.matmul %21, %23, %cst_17 {dimension_numbers = #tpu.dot_dimension_numbers<[1], [0], [0], [1], [0, 0, 1, 1], [], []>} : vector<8x128xbf16>, vector<128x128xbf16>, vector<8x128xf32> -> vector<8x128xf32>
    %c2_18 = arith.constant 2 : index
    %c0_19 = arith.constant 0 : index
    %c0_20 = arith.constant 0 : index
    %25 = vector.load %arg3[%c2_18, %c0_19, %c0_20] : memref<3x1x128xf32, #tpu.memory_space<vmem>>, vector<1x1x128xf32>
    %26 = vector.shape_cast %25 : vector<1x1x128xf32> to vector<1x128xf32>
    %27 = vector.broadcast %26 : vector<1x128xf32> to vector<8x128xf32>
    %28 = arith.addf %24, %27 : vector<8x128xf32>
    %c0_21 = arith.constant 0 : index
    %c0_22 = arith.constant 0 : index
    %29 = vector.load %arg4[%c0_21, %c0_22] : memref<8x128xf32, #tpu.memory_space<vmem>>, vector<8x128xf32>
    tpu.vector_store %arg4[%c0_21, %c0_22], %28 {strides = array<i32>} : memref<8x128xf32, #tpu.memory_space<vmem>>, vector<8x128xf32>,
    return
  }
  func.func @transform_0(%arg0: i32) -> (i32, i32) {
    %c0_i32 = arith.constant 0 : i32
    %c0_i32_0 = arith.constant 0 : i32
    return %arg0, %c0_i32 : i32, i32
  }
  func.func @transform_1(%arg0: i32) -> (i32, i32, i32) {
    %c0_i32 = arith.constant 0 : i32
    %c0_i32_0 = arith.constant 0 : i32
    %c0_i32_1 = arith.constant 0 : i32
    %c0_i32_2 = arith.constant 0 : i32
    return %c0_i32, %c0_i32_0, %c0_i32_1 : i32, i32, i32
  }
  func.func @transform_2(%arg0: i32) -> (i32, i32, i32) {
    %c0_i32 = arith.constant 0 : i32
    %c0_i32_0 = arith.constant 0 : i32
    %c0_i32_1 = arith.constant 0 : i32
    %c0_i32_2 = arith.constant 0 : i32
    return %c0_i32, %c0_i32_0, %c0_i32_1 : i32, i32, i32
  }
  func.func @transform_3(%arg0: i32) -> (i32, i32) {
    %c0_i32 = arith.constant 0 : i32
    %c0_i32_0 = arith.constant 0 : i32
    return %arg0, %c0_i32 : i32, i32
  }
}

</mosaic_0001>

<llo_original>
// kernel: tpu_custom_call.1
$region0: #{tpu_custom_call.1}
  #allocation0 [shape = 'u32[]', space=smem, size = 0x4, offset = 0x4, fixed_abs, tag = 'smem constant byte address 0x4 - core index']
  #allocation1 [shape = 'u32[144,128]{1,0:T(1,128)}', space=vmem, size = 0x12000, scoped, tag = 'internal scratch']
  %s0 = inlined_call_operand.hbm [shape: f32[8,128], index: 0, kind: input, shape index: {}]
  %s1 = inlined_call_operand.hbm [shape: bf16[3,128,128], index: 1, kind: input, shape index: {}]
  %s2 = inlined_call_operand.vmem [shape: f32[3,1,128], index: 2, kind: input, shape index: {}]
  %s3 = inlined_call_operand.hbm [shape: f32[8,128], index: 3, kind: output, shape index: {}]
  %s4 = sld [smem:[#allocation0]]
  $region30: #{tpu_custom_call.1} parent=0
    _
  %s6 = ssub.s32 1, %s4
  %s7 = scalar_select 0, %s6, %s4
  $region1: #{tpu_custom_call.1} parent=0
    #allocation2 [shape = 'u8[4096]{0}', space=vmem, size = 0x1000, scoped, tag = 'input window, operand 0, single buffered']
    #allocation3 [shape = 's32[1]{0}', space=sflag, size = 0x4, scoped, tag = 'scoped memory for tpu_custom_call.1']
    #allocation4 [shape = 's32[1]{0}', space=sflag, size = 0x4, scoped, tag = 'scoped memory for tpu_custom_call.1']
    #allocation5 [shape = 'u8[98304]{0}', space=vmem, size = 0x18000, scoped, tag = 'input window, operand 1, single buffered']
    #allocation6 [shape = 's32[1]{0}', space=sflag, size = 0x4, scoped, tag = 'scoped memory for tpu_custom_call.1']
    #allocation7 [shape = 'u8[4096]{0}', space=vmem, size = 0x1000, scoped, tag = 'output window, operand 0, single buffered']
    %8 = vsyncpa [#allocation3], 0
    %9 = vsyncpa [#allocation6], 0
    %10 = vsyncpa [#allocation4], 0
    // Predicated region
    $region2: #{tpu_custom_call.1} parent=1 // pred_check
      _
    $region3: #{tpu_custom_call.1} parent=1 // pred_check_branch
      %12 = sbr.rel (0) target = $region5
    $region4: #{tpu_custom_call.1} parent=1 // pred_region
      %s14 = ssub.s32 128, 128
      %15 = vsyncadd [#allocation3], %s14
      %s17 = sshll.u32 [#allocation2], 4
      %s18 = int_to_ptr.vmem [resolvable:$true] %s17
      %20 = dma.hbm_to_vmem [thread:$0]  %s0, 128, %s18, [#allocation3]
    $region5: #{tpu_custom_call.1} parent=1 // pred_fallthru
      _
    // Predicated region
    $region6: #{tpu_custom_call.1} parent=1 // pred_check
      _
    $region7: #{tpu_custom_call.1} parent=1 // pred_check_branch
      %22 = sbr.rel (0) target = $region9
    $region8: #{tpu_custom_call.1} parent=1 // pred_region
      %s24 = ssub.s32 3072, 3072
      %25 = vsyncadd [#allocation6], %s24
      %s26 = sshll.u32 [#allocation5], 4
      %s27 = int_to_ptr.vmem [resolvable:$true] %s26
      %32 = dma.hbm_to_vmem [thread:$0]  %s1, 3072, %s27, [#allocation6], 64, 64, 4
    $region9: #{tpu_custom_call.1} parent=1 // pred_fallthru
      _
    // Predicated region
    $region10: #{tpu_custom_call.1} parent=1 // pred_check
      _
    $region11: #{tpu_custom_call.1} parent=1 // pred_check_branch
      %34 = sbr.rel (0) target = $region13
    $region12: #{tpu_custom_call.1} parent=1 // pred_region
      _
    $region13: #{tpu_custom_call.1} parent=1 // pred_fallthru
      _
    // Predicated region
    $region14: #{tpu_custom_call.1} parent=1 // pred_check
      _
    $region15: #{tpu_custom_call.1} parent=1 // pred_check_branch
      %36 = sbr.rel (0) target = $region17
    $region16: #{tpu_custom_call.1} parent=1 // pred_region
      %37 = dma.done [#allocation3], 128
    $region17: #{tpu_custom_call.1} parent=1 // pred_fallthru
      _
    // Predicated region
    $region18: #{tpu_custom_call.1} parent=1 // pred_check
      _
    $region19: #{tpu_custom_call.1} parent=1 // pred_check_branch
      %39 = sbr.rel (0) target = $region21
    $region20: #{tpu_custom_call.1} parent=1 // pred_region
      %40 = dma.done [#allocation6], 3072
    $region21: #{tpu_custom_call.1} parent=1 // pred_fallthru
      _
    %v42 = vld [vmem:[#allocation2] sm:$0xff]
    %v43 = vpack.c.bf16 %v42, %v42
    %v44 = vld [vmem:[#allocation5] sm:$0xf]
    %v45 = vld [vmem:[#allocation5 + $0x4] sm:$0xf]
    %v46 = vld [vmem:[#allocation5 + $0x8] sm:$0xf]
    %v47 = vld [vmem:[#allocation5 + $0xc] sm:$0xf]
    %v48 = vld [vmem:[#allocation5 + $0x10] sm:$0xf]
    %v49 = vld [vmem:[#allocation5 + $0x14] sm:$0xf]
    %v50 = vld [vmem:[#allocation5 + $0x18] sm:$0xf]
    %v51 = vld [vmem:[#allocation5 + $0x1c] sm:$0xf]
    %v52 = vld [vmem:[#allocation5 + $0x20] sm:$0xf]
    %v53 = vld [vmem:[#allocation5 + $0x24] sm:$0xf]
    %v54 = vld [vmem:[#allocation5 + $0x28] sm:$0xf]
    %v55 = vld [vmem:[#allocation5 + $0x2c] sm:$0xf]
    %v56 = vld [vmem:[#allocation5 + $0x30] sm:$0xf]
    %v57 = vld [vmem:[#allocation5 + $0x34] sm:$0xf]
    %v58 = vld [vmem:[#allocation5 + $0x38] sm:$0xf]
    %v59 = vld [vmem:[#allocation5 + $0x3c] sm:$0xf]
    %v60 = vld [vmem:[%s2] sm:$0x1]
    %v62 = vlaneseq
    %v63 = vshrl.u32 %v62, 7
    %v64 = vsub.s32 0, %v63
    %v65 = vrot.slane %v60, %v64
    %v83 = vunpack.c.l.b16 %v44
    %v84 = vunpack.c.l.b16 %v45
    %v85 = vunpack.c.l.b16 %v46
    %v86 = vunpack.c.l.b16 %v47
    %v87 = vunpack.c.l.b16 %v48
    %v88 = vunpack.c.l.b16 %v49
    %v89 = vunpack.c.l.b16 %v50
    %v90 = vunpack.c.l.b16 %v51
    %v91 = vunpack.c.l.b16 %v52
    %v92 = vunpack.c.l.b16 %v53
    %v93 = vunpack.c.l.b16 %v54
    %v94 = vunpack.c.l.b16 %v55
    %v95 = vunpack.c.l.b16 %v56
    %v96 = vunpack.c.l.b16 %v57
    %v97 = vunpack.c.l.b16 %v58
    %v98 = vunpack.c.l.b16 %v59
    %v99 = vpack.c.b16 %v84, %v83
    %v100 = vpack.c.b16 %v86, %v85
    %v101 = vpack.c.b16 %v88, %v87
    %v102 = vpack.c.b16 %v90, %v89
    %v103 = vpack.c.b16 %v92, %v91
    %v104 = vpack.c.b16 %v94, %v93
    %v105 = vpack.c.b16 %v96, %v95
    %v106 = vpack.c.b16 %v98, %v97
    %115 = vmatprep.subr.bf16.mxu0 0
    %116 = vmatpush1.bf16.msra.mxu0 %v106
    %117 = vmatprep.subr.bf16.mxu0 0
    %118 = vmatpush1.bf16.msra.mxu0 %v105
    %119 = vmatprep.subr.bf16.mxu0 0
    %120 = vmatpush1.bf16.msra.mxu0 %v104
    %121 = vmatprep.subr.bf16.mxu0 0
    %122 = vmatpush1.bf16.msra.mxu0 %v103
    %123 = vmatprep.subr.bf16.mxu0 0
    %124 = vmatpush1.bf16.msra.mxu0 %v102
    %125 = vmatprep.subr.bf16.mxu0 0
    %126 = vmatpush1.bf16.msra.mxu0 %v101
    %127 = vmatprep.subr.bf16.mxu0 0
    %128 = vmatpush1.bf16.msra.mxu0 %v100
    %129 = vmatprep.subr.bf16.mxu0 0
    %130 = vmatpush1.bf16.msra.mxu0 %v99
    %131 = vmatprep.subr.bf16.mxu0 0
    %132 = vmatpush2.bf16.msra.mxu0 0
    %133 = vmatprep.subr.bf16.mxu0 0
    %134 = vmatpush2.bf16.msra.mxu0 0
    %135 = vmatprep.subr.bf16.mxu0 0
    %136 = vmatpush2.bf16.msra.mxu0 0
    %137 = vmatprep.subr.bf16.mxu0 0
    %138 = vmatpush2.bf16.msra.mxu0 0
    %139 = vmatprep.subr.bf16.mxu0 0
    %140 = vmatpush2.bf16.msra.mxu0 0
    %141 = vmatprep.subr.bf16.mxu0 0
    %142 = vmatpush2.bf16.msra.mxu0 0
    %143 = vmatprep.subr.bf16.mxu0 0
    %144 = vmatpush2.bf16.msra.mxu0 0
    %145 = vmatprep.subr.bf16.mxu0 0
    %146 = vmatpush2.bf16.msra.mxu0 0
    %147 = vmatprep.mubr.bf16.mxu0 0
    %148 = vmatmul.mubr.bf16.gmra.mxu0 %v43
    %v149 = vpop.f32.mrf.mxu0
    %v150 = vadd.f32 %v65, %v149
    %v151 = vpop.f32.mrf.mxu0
    %v152 = vpop.f32.mrf.mxu0
    %v153 = vpop.f32.mrf.mxu0
    %154 = vdwg.mxu0
    %v155 = vmax.f32 %v150, 0.0
    %v156 = vpack.c.bf16 %v155, %v155
    %s157 = scalar_lea.vmem [#allocation5], 64
    %v158 = vld [vmem:[%s157] sm:$0xf]
    %v159 = vld [vmem:[%s157 + $0x4] sm:$0xf]
    %v160 = vld [vmem:[%s157 + $0x8] sm:$0xf]
    %v161 = vld [vmem:[%s157 + $0xc] sm:$0xf]
    %v162 = vld [vmem:[%s157 + $0x10] sm:$0xf]
    %v163 = vld [vmem:[%s157 + $0x14] sm:$0xf]
    %v164 = vld [vmem:[%s157 + $0x18] sm:$0xf]
    %v165 = vld [vmem:[%s157 + $0x1c] sm:$0xf]
    %v166 = vld [vmem:[%s157 + $0x20] sm:$0xf]
    %v167 = vld [vmem:[%s157 + $0x24] sm:$0xf]
    %v168 = vld [vmem:[%s157 + $0x28] sm:$0xf]
    %v169 = vld [vmem:[%s157 + $0x2c] sm:$0xf]
    %v170 = vld [vmem:[%s157 + $0x30] sm:$0xf]
    %v171 = vld [vmem:[%s157 + $0x34] sm:$0xf]
    %v172 = vld [vmem:[%s157 + $0x38] sm:$0xf]
    %v173 = vld [vmem:[%s157 + $0x3c] sm:$0xf]
    %s174 = scalar_lea.vmem %s2, 1
    %v175 = vld [vmem:[%s174] sm:$0x1]
    %v177 = vlaneseq
    %v178 = vshrl.u32 %v177, 7
    %v179 = vsub.s32 0, %v178
    %v180 = vrot.slane %v175, %v179
    %v198 = vunpack.c.l.b16 %v158
    %v199 = vunpack.c.l.b16 %v159
    %v200 = vunpack.c.l.b16 %v160
    %v201 = vunpack.c.l.b16 %v161
    %v202 = vunpack.c.l.b16 %v162
    %v203 = vunpack.c.l.b16 %v163
    %v204 = vunpack.c.l.b16 %v164
    %v205 = vunpack.c.l.b16 %v165
    %v206 = vunpack.c.l.b16 %v166
    %v207 = vunpack.c.l.b16 %v167
    %v208 = vunpack.c.l.b16 %v168
    %v209 = vunpack.c.l.b16 %v169
    %v210 = vunpack.c.l.b16 %v170
    %v211 = vunpack.c.l.b16 %v171
    %v212 = vunpack.c.l.b16 %v172
    %v213 = vunpack.c.l.b16 %v173
    %v214 = vpack.c.b16 %v199, %v198
    %v215 = vpack.c.b16 %v201, %v200
    %v216 = vpack.c.b16 %v203, %v202
    %v217 = vpack.c.b16 %v205, %v204
    %v218 = vpack.c.b16 %v207, %v206
    %v219 = vpack.c.b16 %v209, %v208
    %v220 = vpack.c.b16 %v211, %v210
    %v221 = vpack.c.b16 %v213, %v212
    %230 = vmatprep.subr.bf16.mxu0 0
    %231 = vmatpush1.bf16.msra.mxu0 %v221
    %232 = vmatprep.subr.bf16.mxu0 0
    %233 = vmatpush1.bf16.msra.mxu0 %v220
    %234 = vmatprep.subr.bf16.mxu0 0
    %235 = vmatpush1.bf16.msra.mxu0 %v219
    %236 = vmatprep.subr.bf16.mxu0 0
    %237 = vmatpush1.bf16.msra.mxu0 %v218
    %238 = vmatprep.subr.bf16.mxu0 0
    %239 = vmatpush1.bf16.msra.mxu0 %v217
    %240 = vmatprep.subr.bf16.mxu0 0
    %241 = vmatpush1.bf16.msra.mxu0 %v216
    %242 = vmatprep.subr.bf16.mxu0 0
    %243 = vmatpush1.bf16.msra.mxu0 %v215
    %244 = vmatprep.subr.bf16.mxu0 0
    %245 = vmatpush1.bf16.msra.mxu0 %v214
    %246 = vmatprep.subr.bf16.mxu0 0
    %247 = vmatpush2.bf16.msra.mxu0 0
    %248 = vmatprep.subr.bf16.mxu0 0
    %249 = vmatpush2.bf16.msra.mxu0 0
    %250 = vmatprep.subr.bf16.mxu0 0
    %251 = vmatpush2.bf16.msra.mxu0 0
    %252 = vmatprep.subr.bf16.mxu0 0
    %253 = vmatpush2.bf16.msra.mxu0 0
    %254 = vmatprep.subr.bf16.mxu0 0
    %255 = vmatpush2.bf16.msra.mxu0 0
    %256 = vmatprep.subr.bf16.mxu0 0
    %257 = vmatpush2.bf16.msra.mxu0 0
    %258 = vmatprep.subr.bf16.mxu0 0
    %259 = vmatpush2.bf16.msra.mxu0 0
    %260 = vmatprep.subr.bf16.mxu0 0
    %261 = vmatpush2.bf16.msra.mxu0 0
    %262 = vmatprep.mubr.bf16.mxu0 0
    %263 = vmatmul.mubr.bf16.gmra.mxu0 %v156
    %v264 = vpop.f32.mrf.mxu0
    %v265 = vadd.f32 %v180, %v264
    %v266 = vpop.f32.mrf.mxu0
    %v267 = vpop.f32.mrf.mxu0
    %v268 = vpop.f32.mrf.mxu0
    %269 = vdwg.mxu0
    %v270 = vmax.f32 %v265, 0.0
    %v271 = vpack.c.bf16 %v270, %v270
    %s272 = scalar_lea.vmem [#allocation5], 128
    %v273 = vld [vmem:[%s272] sm:$0xf]
    %v274 = vld [vmem:[%s272 + $0x4] sm:$0xf]
    %v275 = vld [vmem:[%s272 + $0x8] sm:$0xf]
    %v276 = vld [vmem:[%s272 + $0xc] sm:$0xf]
    %v277 = vld [vmem:[%s272 + $0x10] sm:$0xf]
    %v278 = vld [vmem:[%s272 + $0x14] sm:$0xf]
    %v279 = vld [vmem:[%s272 + $0x18] sm:$0xf]
    %v280 = vld [vmem:[%s272 + $0x1c] sm:$0xf]
    %v281 = vld [vmem:[%s272 + $0x20] sm:$0xf]
    %v282 = vld [vmem:[%s272 + $0x24] sm:$0xf]
    %v283 = vld [vmem:[%s272 + $0x28] sm:$0xf]
    %v284 = vld [vmem:[%s272 + $0x2c] sm:$0xf]
    %v285 = vld [vmem:[%s272 + $0x30] sm:$0xf]
    %v286 = vld [vmem:[%s272 + $0x34] sm:$0xf]
    %v287 = vld [vmem:[%s272 + $0x38] sm:$0xf]
    %v288 = vld [vmem:[%s272 + $0x3c] sm:$0xf]
    %s289 = scalar_lea.vmem %s2, 2
    %v290 = vld [vmem:[%s289] sm:$0x1]
    %v292 = vlaneseq
    %v293 = vshrl.u32 %v292, 7
    %v294 = vsub.s32 0, %v293
    %v295 = vrot.slane %v290, %v294
    %v313 = vunpack.c.l.b16 %v273
    %v314 = vunpack.c.l.b16 %v274
    %v315 = vunpack.c.l.b16 %v275
    %v316 = vunpack.c.l.b16 %v276
    %v317 = vunpack.c.l.b16 %v277
    %v318 = vunpack.c.l.b16 %v278
    %v319 = vunpack.c.l.b16 %v279
    %v320 = vunpack.c.l.b16 %v280
    %v321 = vunpack.c.l.b16 %v281
    %v322 = vunpack.c.l.b16 %v282
    %v323 = vunpack.c.l.b16 %v283
    %v324 = vunpack.c.l.b16 %v284
    %v325 = vunpack.c.l.b16 %v285
    %v326 = vunpack.c.l.b16 %v286
    %v327 = vunpack.c.l.b16 %v287
    %v328 = vunpack.c.l.b16 %v288
    %v329 = vpack.c.b16 %v314, %v313
    %v330 = vpack.c.b16 %v316, %v315
    %v331 = vpack.c.b16 %v318, %v317
    %v332 = vpack.c.b16 %v320, %v319
    %v333 = vpack.c.b16 %v322, %v321
    %v334 = vpack.c.b16 %v324, %v323
    %v335 = vpack.c.b16 %v326, %v325
    %v336 = vpack.c.b16 %v328, %v327
    %345 = vmatprep.subr.bf16.mxu0 0
    %346 = vmatpush1.bf16.msra.mxu0 %v336
    %347 = vmatprep.subr.bf16.mxu0 0
    %348 = vmatpush1.bf16.msra.mxu0 %v335
    %349 = vmatprep.subr.bf16.mxu0 0
    %350 = vmatpush1.bf16.msra.mxu0 %v334
    %351 = vmatprep.subr.bf16.mxu0 0
    %352 = vmatpush1.bf16.msra.mxu0 %v333
    %353 = vmatprep.subr.bf16.mxu0 0
    %354 = vmatpush1.bf16.msra.mxu0 %v332
    %355 = vmatprep.subr.bf16.mxu0 0
    %356 = vmatpush1.bf16.msra.mxu0 %v331
    %357 = vmatprep.subr.bf16.mxu0 0
    %358 = vmatpush1.bf16.msra.mxu0 %v330
    %359 = vmatprep.subr.bf16.mxu0 0
    %360 = vmatpush1.bf16.msra.mxu0 %v329
    %361 = vmatprep.subr.bf16.mxu0 0
    %362 = vmatpush2.bf16.msra.mxu0 0
    %363 = vmatprep.subr.bf16.mxu0 0
    %364 = vmatpush2.bf16.msra.mxu0 0
    %365 = vmatprep.subr.bf16.mxu0 0
    %366 = vmatpush2.bf16.msra.mxu0 0
    %367 = vmatprep.subr.bf16.mxu0 0
    %368 = vmatpush2.bf16.msra.mxu0 0
    %369 = vmatprep.subr.bf16.mxu0 0
    %370 = vmatpush2.bf16.msra.mxu0 0
    %371 = vmatprep.subr.bf16.mxu0 0
    %372 = vmatpush2.bf16.msra.mxu0 0
    %373 = vmatprep.subr.bf16.mxu0 0
    %374 = vmatpush2.bf16.msra.mxu0 0
    %375 = vmatprep.subr.bf16.mxu0 0
    %376 = vmatpush2.bf16.msra.mxu0 0
    %377 = vmatprep.mubr.bf16.mxu0 0
    %378 = vmatmul.mubr.bf16.gmra.mxu0 %v271
    %v379 = vpop.f32.mrf.mxu0
    %v380 = vadd.f32 %v295, %v379
    %v381 = vpop.f32.mrf.mxu0
    %v382 = vpop.f32.mrf.mxu0
    %v383 = vpop.f32.mrf.mxu0
    %384 = vdwg.mxu0
    %385 = vst [vmem:[#allocation7] sm:$0xff] %v380
    // Predicated region
    $region22: #{tpu_custom_call.1} parent=1 // pred_check
      _
    $region23: #{tpu_custom_call.1} parent=1 // pred_check_branch
      %387 = sbr.rel (0) target = $region25
    $region24: #{tpu_custom_call.1} parent=1 // pred_region
      %s389 = ssub.s32 128, 128
      %390 = vsyncadd [#allocation4], %s389
      %s392 = sshll.u32 [#allocation7], 4
      %s393 = int_to_ptr.vmem [resolvable:$true] %s392
      %395 = dma.vmem_to_hbm [thread:$0]  %s393, 128, %s3, [#allocation4]
    $region25: #{tpu_custom_call.1} parent=1 // pred_fallthru
      _
    // Predicated region
    $region26: #{tpu_custom_call.1} parent=1 // pred_check
      _
    $region27: #{tpu_custom_call.1} parent=1 // pred_check_branch
      %397 = sbr.rel (0) target = $region29
    $region28: #{tpu_custom_call.1} parent=1 // pred_region
      %398 = dma.done [#allocation4], 128
    $region29: #{tpu_custom_call.1} parent=1 // pred_fallthru
      _
    %399 = vsyncpa [#allocation3], 1
    %400 = vsyncpa [#allocation6], 1
    %401 = vsyncpa [#allocation4], 1

</llo_original>
